<compile_context>
chip_gen: v7x
topology: tpu7x:2x2x1
jax: 0.10.0
libtpu: 0.0.40
codegen_flags: <defaults>
</compile_context>

<pallas_src>
import jax
import jax.numpy as jnp
from jax.experimental import pallas as pl
from jax.experimental.pallas import tpu as pltpu


def _round_up(n, m):
    return ((n + m - 1) // m) * m


def _mlp_kernel(x_ref,
                w1_ref, b1_ref,
                w2_ref, b2_ref,
                w3_ref, b3_ref,
                w4_ref, b4_ref,
                w5_ref, b5_ref,
                o_ref):
    """Fused 5-layer MLP + softmax.

    x:       (tb, 83)   f32  raw input rows (cast to bf16 here)
    w1:      (83, Hp)   bf16
    w2..w4:  (Hp, Hp)   bf16
    w5:      (Hp, 128)  bf16 (pad columns are zero)
    b1..b4:  (1, Hp)    f32
    b5:      (1, 128)   f32, pad lanes = -1e30 (class mask folded in)
    out:     (tb, 9)    f32 softmax probabilities
    """
    x = x_ref[...].astype(jnp.bfloat16)

    h = jnp.dot(x, w1_ref[...], preferred_element_type=jnp.float32) + b1_ref[...]
    h = jnp.maximum(h, 0.0).astype(jnp.bfloat16)

    h = jnp.dot(h, w2_ref[...], preferred_element_type=jnp.float32) + b2_ref[...]
    h = jnp.maximum(h, 0.0).astype(jnp.bfloat16)

    h = jnp.dot(h, w3_ref[...], preferred_element_type=jnp.float32) + b3_ref[...]
    h = jnp.maximum(h, 0.0).astype(jnp.bfloat16)

    h = jnp.dot(h, w4_ref[...], preferred_element_type=jnp.float32) + b4_ref[...]
    h = jnp.maximum(h, 0.0).astype(jnp.bfloat16)

    # Padded logit lanes get -1e30 from the padded bias (w5 pad cols are zero),
    # so the softmax only sees the 9 real classes -- no iota / where needed.
    logits = jnp.dot(h, w5_ref[...], preferred_element_type=jnp.float32) + b5_ref[...]

    m = jnp.max(logits, axis=-1, keepdims=True)
    e = jnp.exp(logits - m)
    s = jnp.sum(e, axis=-1, keepdims=True)
    probs = e * pl.reciprocal(s, approx=True)

    # Store only the real class lanes (narrow output block).
    o_ref[...] = probs[:, : o_ref.shape[1]]


def prepare_params(params):
    """One-time pad + cast of the 10 weight/bias arrays (outside the hot path)."""
    w1, b1, w2, b2, w3, b3, w4, b4, w5, b5 = params
    fin = w1.shape[0]            # 83
    H = w1.shape[1]
    C = w5.shape[1]              # 9
    h_p = _round_up(H, 128)
    c_p = _round_up(C, 128)

    def padw(w, rows, cols):
        w = jnp.pad(w, ((0, rows - w.shape[0]), (0, cols - w.shape[1])))
        return w.astype(jnp.bfloat16)

    def padb(b, cols, pad_value=0.0):
        b = jnp.asarray(b, jnp.float32).reshape(1, -1)
        return jnp.pad(b, ((0, 0), (0, cols - b.shape[1])),
                       constant_values=pad_value)

    return {
        "num_classes": C,
        "w1": padw(w1, fin, h_p), "b1": padb(b1, h_p),          # keep K = 83
        "w2": padw(w2, h_p, h_p), "b2": padb(b2, h_p),
        "w3": padw(w3, h_p, h_p), "b3": padb(b3, h_p),
        "w4": padw(w4, h_p, h_p), "b4": padb(b4, h_p),
        "w5": padw(w5, h_p, c_p),
        "b5": padb(b5, c_p, pad_value=-1e30),                   # class mask folded in
    }


def _choose_block_rows(batch, block_rows):
    # Multiple of 16 (bf16 sublane packing); ensure >= 2 grid steps for large
    # batches so both v7x TensorCores get work under "parallel".
    tb = min(_round_up(block_rows, 16), _round_up(pl.cdiv(batch, 2), 16))
    return max(tb, 16)


def what_where_forward(x, prepared, *, block_rows=2048):
    """Fused MLP forward. x: (B, 83) f32. Returns (B, 9) f32 softmax probs."""
    x = x.astype(jnp.float32)
    B, fin = x.shape
    C = prepared["num_classes"]

    w1, b1 = prepared["w1"], prepared["b1"]
    w2, b2 = prepared["w2"], prepared["b2"]
    w3, b3 = prepared["w3"], prepared["b3"]
    w4, b4 = prepared["w4"], prepared["b4"]
    w5, b5 = prepared["w5"], prepared["b5"]

    tb = _choose_block_rows(B, block_rows)
    grid = (pl.cdiv(B, tb),)

    def resident(arr):
        # Full-array block, constant index -> stays VMEM-resident across grid.
        return pl.BlockSpec(arr.shape, lambda i: (0, 0))

    out = pl.pallas_call(
        _mlp_kernel,
        out_shape=jax.ShapeDtypeStruct((B, C), jnp.float32),
        grid=grid,
        in_specs=[
            pl.BlockSpec((tb, fin), lambda i: (i, 0)),
            resident(w1), resident(b1),
            resident(w2), resident(b2),
            resident(w3), resident(b3),
            resident(w4), resident(b4),
            resident(w5), resident(b5),
        ],
        out_specs=pl.BlockSpec((tb, C), lambda i: (i, 0)),
        compiler_params=pltpu.CompilerParams(
            dimension_semantics=("parallel",)),
    )(x, w1, b1, w2, b2, w3, b3, w4, b4, w5, b5)

    return out


def init_params(key, hidden_size):
    """Deterministic init mirroring nn.Linear (uniform +-1/sqrt(fan_in)),
    biases zeroed (the module calls initialise_biases()). f32 masters."""
    dims = [(83, hidden_size),
            (hidden_size, hidden_size),
            (hidden_size, hidden_size),
            (hidden_size, hidden_size),
            (hidden_size, 9)]
    params = []
    for i, (fan_in, fan_out) in enumerate(dims):
        k = jax.random.fold_in(key, i)
        bound = 1.0 / jnp.sqrt(jnp.float32(fan_in))
        w = jax.random.uniform(k, (fan_in, fan_out), jnp.float32, -bound, bound)
        b = jnp.zeros((1, fan_out), jnp.float32)
        params.extend([w, b])
    return params


def reference_forward_f32(x, params):
    """Plain-JAX f32 reference of the PyTorch forward pass."""
    w1, b1, w2, b2, w3, b3, w4, b4, w5, b5 = params
    h = jax.nn.relu(x @ w1 + b1)
    h = jax.nn.relu(h @ w2 + b2)
    h = jax.nn.relu(h @ w3 + b3)
    h = jax.nn.relu(h @ w4 + b4)
    return jax.nn.softmax(h @ w5 + b5, axis=1)


def reference_forward_bf16(x, params):
    """Plain-JAX reference with the same bf16-in / f32-accum numerics as the kernel."""
    w1, b1, w2, b2, w3, b3, w4, b4, w5, b5 = params

    def layer(h, w, b):
        return jnp.dot(h.astype(jnp.bfloat16), w.astype(jnp.bfloat16),
                       preferred_element_type=jnp.float32) + b

    h = jax.nn.relu(layer(x, w1, b1))
    h = jax.nn.relu(layer(h, w2, b2))
    h = jax.nn.relu(layer(h, w3, b3))
    h = jax.nn.relu(layer(h, w4, b4))
    return jax.nn.softmax(layer(h, w5, b5), axis=1)


if __name__ == "__main__":
    key = jax.random.PRNGKey(0)
    hidden_size = 32   # small stand-in for the default hidden_size=100
    batch = 10         # module's default batch_size

    # Synthetic binary 9x9 grid input (81 pixels) + 2-dim context, like X_train rows.
    kx, kp = jax.random.split(key)
    grid_img = (jax.random.uniform(kx, (batch, 81)) > 0.8).astype(jnp.float32)
    ctx = jnp.tile(jnp.array([[1.0, 0.0]], jnp.float32), (batch, 1))
    x = jnp.concatenate([grid_img, ctx], axis=1)          # (batch, 83)

    params = init_params(kp, hidden_size)
    prepared = prepare_params(params)   # one-time pad/cast, outside the hot path

    # --- small-batch run (single grid step, partial last block) ---
    out = jax.block_until_ready(what_where_forward(x, prepared))
    assert out.shape == (batch, 9)
    ref_bf16 = reference_forward_bf16(x, params)
    ref_f32 = reference_forward_f32(x, params)
    assert jnp.allclose(out, ref_bf16, atol=5e-3, rtol=5e-3)
    assert jnp.allclose(out, ref_f32, atol=5e-2, rtol=5e-2)
    assert jnp.allclose(jnp.sum(out, axis=1), jnp.ones(batch), atol=1e-2)

    # --- larger batch exercising >= 2 grid steps (megacore path on v7x) ---
    big_batch = 600
    kx2 = jax.random.fold_in(key, 7)
    grid2 = (jax.random.uniform(kx2, (big_batch, 81)) > 0.8).astype(jnp.float32)
    ctx2 = jnp.tile(jnp.array([[0.0, 1.0]], jnp.float32), (big_batch, 1))
    x2 = jnp.concatenate([grid2, ctx2], axis=1)           # (600, 83)

    out2 = jax.block_until_ready(what_where_forward(x2, prepared))
    assert out2.shape == (big_batch, 9)
    ref2 = reference_forward_bf16(x2, params)
    assert jnp.allclose(out2, ref2, atol=5e-3, rtol=5e-3)
    assert jnp.allclose(jnp.sum(out2, axis=1), jnp.ones(big_batch), atol=1e-2)

    print("KERNEL_OK")
</pallas_src>

<mosaic_0001>
module attributes {stable_mosaic.version = 11 : i64} {
  func.func @_mlp_kernel(%arg0: i32, %arg1: memref<16x83xf32, #tpu.memory_space<vmem>>, %arg2: memref<83x128xbf16, #tpu.memory_space<vmem>>, %arg3: memref<1x128xf32, #tpu.memory_space<vmem>>, %arg4: memref<128x128xbf16, #tpu.memory_space<vmem>>, %arg5: memref<1x128xf32, #tpu.memory_space<vmem>>, %arg6: memref<128x128xbf16, #tpu.memory_space<vmem>>, %arg7: memref<1x128xf32, #tpu.memory_space<vmem>>, %arg8: memref<128x128xbf16, #tpu.memory_space<vmem>>, %arg9: memref<1x128xf32, #tpu.memory_space<vmem>>, %arg10: memref<128x128xbf16, #tpu.memory_space<vmem>>, %arg11: memref<1x128xf32, #tpu.memory_space<vmem>>, %arg12: memref<16x9xf32, #tpu.memory_space<vmem>>) attributes {dimension_semantics = [#tpu.dimension_semantics<parallel>], iteration_bounds = array<i64: 1>, scalar_prefetch = 0 : i64, scratch_operands = 0 : i64, tpu.core_type = #tpu.core_type<tc>, window_params = [{transform_indices = @transform_0, window_bounds = array<i64: 16, 83>}, {pipeline_mode = #tpu.pipeline_mode<synchronous>, transform_indices = @transform_1, window_bounds = array<i64: 83, 128>}, {pipeline_mode = #tpu.pipeline_mode<synchronous>, transform_indices = @transform_2, window_bounds = array<i64: 1, 128>}, {pipeline_mode = #tpu.pipeline_mode<synchronous>, transform_indices = @transform_3, window_bounds = array<i64: 128, 128>}, {pipeline_mode = #tpu.pipeline_mode<synchronous>, transform_indices = @transform_4, window_bounds = array<i64: 1, 128>}, {pipeline_mode = #tpu.pipeline_mode<synchronous>, transform_indices = @transform_5, window_bounds = array<i64: 128, 128>}, {pipeline_mode = #tpu.pipeline_mode<synchronous>, transform_indices = @transform_6, window_bounds = array<i64: 1, 128>}, {pipeline_mode = #tpu.pipeline_mode<synchronous>, transform_indices = @transform_7, window_bounds = array<i64: 128, 128>}, {pipeline_mode = #tpu.pipeline_mode<synchronous>, transform_indices = @transform_8, window_bounds = array<i64: 1, 128>}, {pipeline_mode = #tpu.pipeline_mode<synchronous>, transform_indices = @transform_9, window_bounds = array<i64: 128, 128>}, {pipeline_mode = #tpu.pipeline_mode<synchronous>, transform_indices = @transform_10, window_bounds = array<i64: 1, 128>}, {transform_indices = @transform_11, window_bounds = array<i64: 16, 9>}]} {
    %c0 = arith.constant 0 : index
    %c0_0 = arith.constant 0 : index
    %0 = vector.load %arg1[%c0, %c0_0] : memref<16x83xf32, #tpu.memory_space<vmem>>, vector<16x83xf32>
    %1 = arith.truncf %0 : vector<16x83xf32> to vector<16x83xbf16>
    %c0_1 = arith.constant 0 : index
    %c0_2 = arith.constant 0 : index
    %2 = vector.load %arg2[%c0_1, %c0_2] : memref<83x128xbf16, #tpu.memory_space<vmem>>, vector<83x128xbf16>
    %cst = arith.constant dense<0.000000e+00> : vector<16x128xf32>
    %3 = tpu.matmul %1, %2, %cst {dimension_numbers = #tpu.dot_dimension_numbers<[1], [0], [0], [1], [0, 0, 1, 1], [], []>} : vector<16x83xbf16>, vector<83x128xbf16>, vector<16x128xf32> -> vector<16x128xf32>
    %c0_3 = arith.constant 0 : index
    %c0_4 = arith.constant 0 : index
    %4 = vector.load %arg3[%c0_3, %c0_4] : memref<1x128xf32, #tpu.memory_space<vmem>>, vector<1x128xf32>
    %5 = vector.broadcast %4 : vector<1x128xf32> to vector<16x128xf32>
    %6 = arith.addf %3, %5 : vector<16x128xf32>
    %cst_5 = arith.constant 0.000000e+00 : f32
    %7 = vector.broadcast %cst_5 : f32 to vector<16x128xf32>
    %8 = arith.maximumf %6, %7 : vector<16x128xf32>
    %9 = arith.truncf %8 : vector<16x128xf32> to vector<16x128xbf16>
    %c0_6 = arith.constant 0 : index
    %c0_7 = arith.constant 0 : index
    %10 = vector.load %arg4[%c0_6, %c0_7] : memref<128x128xbf16, #tpu.memory_space<vmem>>, vector<128x128xbf16>
    %cst_8 = arith.constant dense<0.000000e+00> : vector<16x128xf32>
    %11 = tpu.matmul %9, %10, %cst_8 {dimension_numbers = #tpu.dot_dimension_numbers<[1], [0], [0], [1], [0, 0, 1, 1], [], []>} : vector<16x128xbf16>, vector<128x128xbf16>, vector<16x128xf32> -> vector<16x128xf32>
    %c0_9 = arith.constant 0 : index
    %c0_10 = arith.constant 0 : index
    %12 = vector.load %arg5[%c0_9, %c0_10] : memref<1x128xf32, #tpu.memory_space<vmem>>, vector<1x128xf32>
    %13 = vector.broadcast %12 : vector<1x128xf32> to vector<16x128xf32>
    %14 = arith.addf %11, %13 : vector<16x128xf32>
    %cst_11 = arith.constant 0.000000e+00 : f32
    %15 = vector.broadcast %cst_11 : f32 to vector<16x128xf32>
    %16 = arith.maximumf %14, %15 : vector<16x128xf32>
    %17 = arith.truncf %16 : vector<16x128xf32> to vector<16x128xbf16>
    %c0_12 = arith.constant 0 : index
    %c0_13 = arith.constant 0 : index
    %18 = vector.load %arg6[%c0_12, %c0_13] : memref<128x128xbf16, #tpu.memory_space<vmem>>, vector<128x128xbf16>
    %cst_14 = arith.constant dense<0.000000e+00> : vector<16x128xf32>
    %19 = tpu.matmul %17, %18, %cst_14 {dimension_numbers = #tpu.dot_dimension_numbers<[1], [0], [0], [1], [0, 0, 1, 1], [], []>} : vector<16x128xbf16>, vector<128x128xbf16>, vector<16x128xf32> -> vector<16x128xf32>
    %c0_15 = arith.constant 0 : index
    %c0_16 = arith.constant 0 : index
    %20 = vector.load %arg7[%c0_15, %c0_16] : memref<1x128xf32, #tpu.memory_space<vmem>>, vector<1x128xf32>
    %21 = vector.broadcast %20 : vector<1x128xf32> to vector<16x128xf32>
    %22 = arith.addf %19, %21 : vector<16x128xf32>
    %cst_17 = arith.constant 0.000000e+00 : f32
    %23 = vector.broadcast %cst_17 : f32 to vector<16x128xf32>
    %24 = arith.maximumf %22, %23 : vector<16x128xf32>
    %25 = arith.truncf %24 : vector<16x128xf32> to vector<16x128xbf16>
    %c0_18 = arith.constant 0 : index
    %c0_19 = arith.constant 0 : index
    %26 = vector.load %arg8[%c0_18, %c0_19] : memref<128x128xbf16, #tpu.memory_space<vmem>>, vector<128x128xbf16>
    %cst_20 = arith.constant dense<0.000000e+00> : vector<16x128xf32>
    %27 = tpu.matmul %25, %26, %cst_20 {dimension_numbers = #tpu.dot_dimension_numbers<[1], [0], [0], [1], [0, 0, 1, 1], [], []>} : vector<16x128xbf16>, vector<128x128xbf16>, vector<16x128xf32> -> vector<16x128xf32>
    %c0_21 = arith.constant 0 : index
    %c0_22 = arith.constant 0 : index
    %28 = vector.load %arg9[%c0_21, %c0_22] : memref<1x128xf32, #tpu.memory_space<vmem>>, vector<1x128xf32>
    %29 = vector.broadcast %28 : vector<1x128xf32> to vector<16x128xf32>
    %30 = arith.addf %27, %29 : vector<16x128xf32>
    %cst_23 = arith.constant 0.000000e+00 : f32
    %31 = vector.broadcast %cst_23 : f32 to vector<16x128xf32>
    %32 = arith.maximumf %30, %31 : vector<16x128xf32>
    %33 = arith.truncf %32 : vector<16x128xf32> to vector<16x128xbf16>
    %c0_24 = arith.constant 0 : index
    %c0_25 = arith.constant 0 : index
    %34 = vector.load %arg10[%c0_24, %c0_25] : memref<128x128xbf16, #tpu.memory_space<vmem>>, vector<128x128xbf16>
    %cst_26 = arith.constant dense<0.000000e+00> : vector<16x128xf32>
    %35 = tpu.matmul %33, %34, %cst_26 {dimension_numbers = #tpu.dot_dimension_numbers<[1], [0], [0], [1], [0, 0, 1, 1], [], []>} : vector<16x128xbf16>, vector<128x128xbf16>, vector<16x128xf32> -> vector<16x128xf32>
    %c0_27 = arith.constant 0 : index
    %c0_28 = arith.constant 0 : index
    %36 = vector.load %arg11[%c0_27, %c0_28] : memref<1x128xf32, #tpu.memory_space<vmem>>, vector<1x128xf32>
    %37 = vector.broadcast %36 : vector<1x128xf32> to vector<16x128xf32>
    %38 = arith.addf %35, %37 : vector<16x128xf32>
    %cst_29 = arith.constant dense<0xFF800000> : vector<16xf32>
    %39 = vector.multi_reduction <maximumf>, %38, %cst_29 [1] : vector<16x128xf32> to vector<16xf32>
    %40 = vector.shape_cast %39 : vector<16xf32> to vector<16x1xf32>
    %41 = vector.broadcast %40 : vector<16x1xf32> to vector<16x128xf32>
    %42 = arith.subf %38, %41 : vector<16x128xf32>
    %43 = math.exp %42 : vector<16x128xf32>
    %cst_30 = arith.constant dense<0.000000e+00> : vector<16xf32>
    %44 = vector.multi_reduction <add>, %43, %cst_30 [1] : vector<16x128xf32> to vector<16xf32>
    %45 = vector.shape_cast %44 : vector<16xf32> to vector<16x1xf32>
    %46 = tpu.reciprocal %45 {approx = true} : vector<16x1xf32> -> vector<16x1xf32>
    %47 = vector.broadcast %46 : vector<16x1xf32> to vector<16x128xf32>
    %48 = arith.mulf %43, %47 : vector<16x128xf32>
    %49 = vector.extract_strided_slice %48 {offsets = [0, 0], sizes = [16, 9], strides = [1, 1]} : vector<16x128xf32> to vector<16x9xf32>
    %c0_31 = arith.constant 0 : index
    %c0_32 = arith.constant 0 : index
    %50 = vector.load %arg12[%c0_31, %c0_32] : memref<16x9xf32, #tpu.memory_space<vmem>>, vector<16x9xf32>
    tpu.vector_store %arg12[%c0_31, %c0_32], %49 {strides = array<i32>} : memref<16x9xf32, #tpu.memory_space<vmem>>, vector<16x9xf32>,
    return
  }
  func.func @transform_0(%arg0: i32) -> (i32, i32) {
    %c0_i32 = arith.constant 0 : i32
    %c0_i32_0 = arith.constant 0 : i32
    return %arg0, %c0_i32 : i32, i32
  }
  func.func @transform_1(%arg0: i32) -> (i32, i32) {
    %c0_i32 = arith.constant 0 : i32
    %c0_i32_0 = arith.constant 0 : i32
    %c0_i32_1 = arith.constant 0 : i32
    return %c0_i32, %c0_i32_0 : i32, i32
  }
  func.func @transform_2(%arg0: i32) -> (i32, i32) {
    %c0_i32 = arith.constant 0 : i32
    %c0_i32_0 = arith.constant 0 : i32
    %c0_i32_1 = arith.constant 0 : i32
    return %c0_i32, %c0_i32_0 : i32, i32
  }
  func.func @transform_3(%arg0: i32) -> (i32, i32) {
    %c0_i32 = arith.constant 0 : i32
    %c0_i32_0 = arith.constant 0 : i32
    %c0_i32_1 = arith.constant 0 : i32
    return %c0_i32, %c0_i32_0 : i32, i32
  }
  func.func @transform_4(%arg0: i32) -> (i32, i32) {
    %c0_i32 = arith.constant 0 : i32
    %c0_i32_0 = arith.constant 0 : i32
    %c0_i32_1 = arith.constant 0 : i32
    return %c0_i32, %c0_i32_0 : i32, i32
  }
  func.func @transform_5(%arg0: i32) -> (i32, i32) {
    %c0_i32 = arith.constant 0 : i32
    %c0_i32_0 = arith.constant 0 : i32
    %c0_i32_1 = arith.constant 0 : i32
    return %c0_i32, %c0_i32_0 : i32, i32
  }
  func.func @transform_6(%arg0: i32) -> (i32, i32) {
    %c0_i32 = arith.constant 0 : i32
    %c0_i32_0 = arith.constant 0 : i32
    %c0_i32_1 = arith.constant 0 : i32
    return %c0_i32, %c0_i32_0 : i32, i32
  }
  func.func @transform_7(%arg0: i32) -> (i32, i32) {
    %c0_i32 = arith.constant 0 : i32
    %c0_i32_0 = arith.constant 0 : i32
    %c0_i32_1 = arith.constant 0 : i32
    return %c0_i32, %c0_i32_0 : i32, i32
  }
  func.func @transform_8(%arg0: i32) -> (i32, i32) {
    %c0_i32 = arith.constant 0 : i32
    %c0_i32_0 = arith.constant 0 : i32
    %c0_i32_1 = arith.constant 0 : i32
    return %c0_i32, %c0_i32_0 : i32, i32
  }
  func.func @transform_9(%arg0: i32) -> (i32, i32) {
    %c0_i32 = arith.constant 0 : i32
    %c0_i32_0 = arith.constant 0 : i32
    %c0_i32_1 = arith.constant 0 : i32
    return %c0_i32, %c0_i32_0 : i32, i32
  }
  func.func @transform_10(%arg0: i32) -> (i32, i32) {
    %c0_i32 = arith.constant 0 : i32
    %c0_i32_0 = arith.constant 0 : i32
    %c0_i32_1 = arith.constant 0 : i32
    return %c0_i32, %c0_i32_0 : i32, i32
  }
  func.func @transform_11(%arg0: i32) -> (i32, i32) {
    %c0_i32 = arith.constant 0 : i32
    %c0_i32_0 = arith.constant 0 : i32
    return %arg0, %c0_i32 : i32, i32
  }
}

</mosaic_0001>

<llo_original>
// kernel: tpu_custom_call.1
$region0: #{tpu_custom_call.1}
  #allocation0 [shape = 'u32[]', space=smem, size = 0x4, offset = 0x4, fixed_abs, tag = 'smem constant byte address 0x4 - core index']
  #allocation1 [shape = 'u32[144,128]{1,0:T(1,128)}', space=vmem, size = 0x12000, scoped, tag = 'internal scratch']
  %s0 = inlined_call_operand.hbm [shape: f32[10,83], index: 0, kind: input, shape index: {}]
  %s1 = inlined_call_operand.hbm [shape: bf16[83,128], index: 1, kind: input, shape index: {}]
  %s2 = inlined_call_operand.vmem [shape: f32[1,128], index: 2, kind: input, shape index: {}]
  %s3 = inlined_call_operand.hbm [shape: bf16[128,128], index: 3, kind: input, shape index: {}]
  %s4 = inlined_call_operand.vmem [shape: f32[1,128], index: 4, kind: input, shape index: {}]
  %s5 = inlined_call_operand.hbm [shape: bf16[128,128], index: 5, kind: input, shape index: {}]
  %s6 = inlined_call_operand.vmem [shape: f32[1,128], index: 6, kind: input, shape index: {}]
  %s7 = inlined_call_operand.hbm [shape: bf16[128,128], index: 7, kind: input, shape index: {}]
  %s8 = inlined_call_operand.vmem [shape: f32[1,128], index: 8, kind: input, shape index: {}]
  %s9 = inlined_call_operand.hbm [shape: bf16[128,128], index: 9, kind: input, shape index: {}]
  %s10 = inlined_call_operand.vmem [shape: f32[1,128], index: 10, kind: input, shape index: {}]
  %s11 = inlined_call_operand.hbm [shape: f32[10,9], index: 11, kind: output, shape index: {}]
  %s12 = sld [smem:[#allocation0]]
  $region78: #{tpu_custom_call.1} parent=0
    _
  %s14 = ssub.s32 1, %s12
  %s15 = scalar_select 0, %s14, %s12
  $region1: #{tpu_custom_call.1} parent=0
    #allocation2 [shape = 'u8[8192]{0}', space=vmem, size = 0x2000, scoped, tag = 'input window, operand 0, single buffered']
    #allocation3 [shape = 's32[1]{0}', space=sflag, size = 0x4, scoped, tag = 'scoped memory for tpu_custom_call.1']
    #allocation4 [shape = 's32[1]{0}', space=sflag, size = 0x4, scoped, tag = 'scoped memory for tpu_custom_call.1']
    #allocation5 [shape = 'u8[22528]{0}', space=vmem, size = 0x5800, scoped, tag = 'input window, operand 1, single buffered']
    #allocation6 [shape = 's32[1]{0}', space=sflag, size = 0x4, scoped, tag = 'scoped memory for tpu_custom_call.1']
    #allocation7 [shape = 'u8[32768]{0}', space=vmem, size = 0x8000, scoped, tag = 'input window, operand 3, single buffered']
    #allocation8 [shape = 'u8[32768]{0}', space=vmem, size = 0x8000, scoped, tag = 'input window, operand 5, single buffered']
    #allocation9 [shape = 's32[1]{0}', space=sflag, size = 0x4, scoped, tag = 'scoped memory for tpu_custom_call.1']
    #allocation10 [shape = 'u8[32768]{0}', space=vmem, size = 0x8000, scoped, tag = 'input window, operand 7, single buffered']
    #allocation11 [shape = 'u8[32768]{0}', space=vmem, size = 0x8000, scoped, tag = 'input window, operand 9, single buffered']
    #allocation12 [shape = 's32[1]{0}', space=sflag, size = 0x4, scoped, tag = 'scoped memory for tpu_custom_call.1']
    #allocation13 [shape = 'u8[8192]{0}', space=vmem, size = 0x2000, scoped, tag = 'output window, operand 0, single buffered']
    %16 = vsyncpa [#allocation3], 0
    %17 = vsyncpa [#allocation6], 0
    %18 = vsyncpa [#allocation9], 0
    %19 = vsyncpa [#allocation12], 0
    %20 = vsyncpa [#allocation4], 0
    // Predicated region
    $region2: #{tpu_custom_call.1} parent=1 // pred_check
      _
    $region3: #{tpu_custom_call.1} parent=1 // pred_check_branch
      %22 = sbr.rel (0) target = $region5
    $region4: #{tpu_custom_call.1} parent=1 // pred_region
      %s24 = ssub.s32 256, 256
      %25 = vsyncadd [#allocation3], %s24
      %s26 = sshll.u32 [#allocation2], 4
      %s27 = int_to_ptr.vmem [resolvable:$true] %s26
      %32 = dma.hbm_to_vmem [thread:$0]  %s0, 256, %s27, [#allocation3], 128, 128, 8
    $region5: #{tpu_custom_call.1} parent=1 // pred_fallthru
      _
    // Predicated region
    $region6: #{tpu_custom_call.1} parent=1 // pred_check
      _
    $region7: #{tpu_custom_call.1} parent=1 // pred_check_branch
      %34 = sbr.rel (0) target = $region9
    $region8: #{tpu_custom_call.1} parent=1 // pred_region
      %s36 = ssub.s32 704, 704
      %37 = vsyncadd [#allocation6], %s36
      %s38 = sshll.u32 [#allocation5], 4
      %s39 = int_to_ptr.vmem [resolvable:$true] %s38
      %44 = dma.hbm_to_vmem [thread:$0]  %s1, 704, %s39, [#allocation6], 64, 64, 4
    $region9: #{tpu_custom_call.1} parent=1 // pred_fallthru
      _
    // Predicated region
    $region10: #{tpu_custom_call.1} parent=1 // pred_check
      _
    $region11: #{tpu_custom_call.1} parent=1 // pred_check_branch
      %46 = sbr.rel (0) target = $region13
    $region12: #{tpu_custom_call.1} parent=1 // pred_region
      _
    $region13: #{tpu_custom_call.1} parent=1 // pred_fallthru
      _
    // Predicated region
    $region14: #{tpu_custom_call.1} parent=1 // pred_check
      _
    $region15: #{tpu_custom_call.1} parent=1 // pred_check_branch
      %48 = sbr.rel (0) target = $region17
    $region16: #{tpu_custom_call.1} parent=1 // pred_region
      %s50 = ssub.s32 1024, 1024
      %51 = vsyncadd [#allocation6], %s50
      %s52 = sshll.u32 [#allocation7], 4
      %s53 = int_to_ptr.vmem [resolvable:$true] %s52
      %58 = dma.hbm_to_vmem [thread:$0]  %s3, 1024, %s53, [#allocation6], 64, 64, 4
    $region17: #{tpu_custom_call.1} parent=1 // pred_fallthru
      _
    // Predicated region
    $region18: #{tpu_custom_call.1} parent=1 // pred_check
      _
    $region19: #{tpu_custom_call.1} parent=1 // pred_check_branch
      %60 = sbr.rel (0) target = $region21
    $region20: #{tpu_custom_call.1} parent=1 // pred_region
      _
    $region21: #{tpu_custom_call.1} parent=1 // pred_fallthru
      _
    // Predicated region
    $region22: #{tpu_custom_call.1} parent=1 // pred_check
      _
    $region23: #{tpu_custom_call.1} parent=1 // pred_check_branch
      %62 = sbr.rel (0) target = $region25
    $region24: #{tpu_custom_call.1} parent=1 // pred_region
      %s64 = ssub.s32 1024, 1024
      %65 = vsyncadd [#allocation9], %s64
      %s66 = sshll.u32 [#allocation8], 4
      %s67 = int_to_ptr.vmem [resolvable:$true] %s66
      %72 = dma.hbm_to_vmem [thread:$0]  %s5, 1024, %s67, [#allocation9], 64, 64, 4
    $region25: #{tpu_custom_call.1} parent=1 // pred_fallthru
      _
    // Predicated region
    $region26: #{tpu_custom_call.1} parent=1 // pred_check
      _
    $region27: #{tpu_custom_call.1} parent=1 // pred_check_branch
      %74 = sbr.rel (0) target = $region29
    $region28: #{tpu_custom_call.1} parent=1 // pred_region
      _
    $region29: #{tpu_custom_call.1} parent=1 // pred_fallthru
      _
    // Predicated region
    $region30: #{tpu_custom_call.1} parent=1 // pred_check
      _
    $region31: #{tpu_custom_call.1} parent=1 // pred_check_branch
      %76 = sbr.rel (0) target = $region33
    $region32: #{tpu_custom_call.1} parent=1 // pred_region
      %s78 = ssub.s32 1024, 1024
      %79 = vsyncadd [#allocation9], %s78
      %s80 = sshll.u32 [#allocation10], 4
      %s81 = int_to_ptr.vmem [resolvable:$true] %s80
      %86 = dma.hbm_to_vmem [thread:$0]  %s7, 1024, %s81, [#allocation9], 64, 64, 4
    $region33: #{tpu_custom_call.1} parent=1 // pred_fallthru
      _
    // Predicated region
    $region34: #{tpu_custom_call.1} parent=1 // pred_check
      _
    $region35: #{tpu_custom_call.1} parent=1 // pred_check_branch
      %88 = sbr.rel (0) target = $region37
    $region36: #{tpu_custom_call.1} parent=1 // pred_region
      _
    $region37: #{tpu_custom_call.1} parent=1 // pred_fallthru
      _
    // Predicated region
    $region38: #{tpu_custom_call.1} parent=1 // pred_check
      _
    $region39: #{tpu_custom_call.1} parent=1 // pred_check_branch
      %90 = sbr.rel (0) target = $region41
    $region40: #{tpu_custom_call.1} parent=1 // pred_region
      %s92 = ssub.s32 1024, 1024
      %93 = vsyncadd [#allocation12], %s92
      %s94 = sshll.u32 [#allocation11], 4
      %s95 = int_to_ptr.vmem [resolvable:$true] %s94
      %100 = dma.hbm_to_vmem [thread:$0]  %s9, 1024, %s95, [#allocation12], 64, 64, 4
    $region41: #{tpu_custom_call.1} parent=1 // pred_fallthru
      _
    // Predicated region
    $region42: #{tpu_custom_call.1} parent=1 // pred_check
      _
    $region43: #{tpu_custom_call.1} parent=1 // pred_check_branch
      %102 = sbr.rel (0) target = $region45
    $region44: #{tpu_custom_call.1} parent=1 // pred_region
      _
    $region45: #{tpu_custom_call.1} parent=1 // pred_fallthru
      _
    // Predicated region
    $region46: #{tpu_custom_call.1} parent=1 // pred_check
      _
    $region47: #{tpu_custom_call.1} parent=1 // pred_check_branch
      %104 = sbr.rel (0) target = $region49
    $region48: #{tpu_custom_call.1} parent=1 // pred_region
      %105 = dma.done [#allocation3], 256
    $region49: #{tpu_custom_call.1} parent=1 // pred_fallthru
      _
    // Predicated region
    $region50: #{tpu_custom_call.1} parent=1 // pred_check
      _
    $region51: #{tpu_custom_call.1} parent=1 // pred_check_branch
      %107 = sbr.rel (0) target = $region53
    $region52: #{tpu_custom_call.1} parent=1 // pred_region
      %108 = dma.done [#allocation6], 704
    $region53: #{tpu_custom_call.1} parent=1 // pred_fallthru
      _
    // Predicated region
    $region54: #{tpu_custom_call.1} parent=1 // pred_check
      _
    $region55: #{tpu_custom_call.1} parent=1 // pred_check_branch
      %110 = sbr.rel (0) target = $region57
    $region56: #{tpu_custom_call.1} parent=1 // pred_region
      %111 = dma.done [#allocation6], 1024
    $region57: #{tpu_custom_call.1} parent=1 // pred_fallthru
      _
    // Predicated region
    $region58: #{tpu_custom_call.1} parent=1 // pred_check
      _
    $region59: #{tpu_custom_call.1} parent=1 // pred_check_branch
      %113 = sbr.rel (0) target = $region61
    $region60: #{tpu_custom_call.1} parent=1 // pred_region
      %114 = dma.done [#allocation9], 1024
    $region61: #{tpu_custom_call.1} parent=1 // pred_fallthru
      _
    // Predicated region
    $region62: #{tpu_custom_call.1} parent=1 // pred_check
      _
    $region63: #{tpu_custom_call.1} parent=1 // pred_check_branch
      %116 = sbr.rel (0) target = $region65
    $region64: #{tpu_custom_call.1} parent=1 // pred_region
      %117 = dma.done [#allocation9], 1024
    $region65: #{tpu_custom_call.1} parent=1 // pred_fallthru
      _
    // Predicated region
    $region66: #{tpu_custom_call.1} parent=1 // pred_check
      _
    $region67: #{tpu_custom_call.1} parent=1 // pred_check_branch
      %119 = sbr.rel (0) target = $region69
    $region68: #{tpu_custom_call.1} parent=1 // pred_region
      %120 = dma.done [#allocation12], 1024
    $region69: #{tpu_custom_call.1} parent=1 // pred_fallthru
      _
    %v122 = vld [vmem:[#allocation2] sm:$0xff]
    %v123 = vld [vmem:[#allocation2 + $0x8] sm:$0xff]
    %v124 = vpack.c.bf16 %v123, %v122
    %v125 = vld [vmem:[#allocation5] sm:$0xf]
    %v126 = vld [vmem:[#allocation5 + $0x4] sm:$0xf]
    %v127 = vld [vmem:[#allocation5 + $0x8] sm:$0xf]
    %v128 = vld [vmem:[#allocation5 + $0xc] sm:$0xf]
    %v129 = vld [vmem:[#allocation5 + $0x10] sm:$0xf]
    %v130 = vld [vmem:[#allocation5 + $0x14] sm:$0xf]
    %v131 = vld [vmem:[#allocation5 + $0x18] sm:$0xf]
    %v132 = vld [vmem:[#allocation5 + $0x1c] sm:$0xf]
    %v133 = vld [vmem:[#allocation5 + $0x20] sm:$0xf]
    %v134 = vld [vmem:[#allocation5 + $0x24] sm:$0xf]
    %v135 = vld [vmem:[#allocation5 + $0x28] sm:$0x3]
    %v136 = vld [vmem:[%s2] sm:$0x1]
    %v138 = vlaneseq
    %v139 = vshrl.u32 %v138, 7
    %v140 = vsub.s32 0, %v139
    %v141 = vrot.slane %v136, %v140
    %v154 = vunpack.c.l.b16 %v125
    %v155 = vunpack.c.l.b16 %v126
    %v156 = vunpack.c.l.b16 %v127
    %v157 = vunpack.c.l.b16 %v128
    %v158 = vunpack.c.l.b16 %v129
    %v159 = vunpack.c.l.b16 %v130
    %v160 = vunpack.c.l.b16 %v131
    %v161 = vunpack.c.l.b16 %v132
    %v162 = vunpack.c.l.b16 %v133
    %v163 = vunpack.c.l.b16 %v134
    %v164 = vunpack.c.l.b16 %v135
    %v165 = vpack.c.b16 %v155, %v154
    %v166 = vpack.c.b16 %v157, %v156
    %v167 = vpack.c.b16 %v159, %v158
    %v168 = vpack.c.b16 %v161, %v160
    %v169 = vpack.c.b16 %v163, %v162
    %v170 = vpack.c.b16 %v164, %v164
    %vm176 = vcmask 678912
    %v178 = vsel %vm176, %v124, 0
    %vm180 = vcmask 1040384
    %vm181 = vcmask 1041408
    %v182 = vsel %vm180, 4294967295, 65535
    %v183 = vsel %vm181, %v182, 0
    %v185 = vand.u32 %v170, %v183
    %187 = vmatprep.subr.bf16.mxu0 0
    %188 = vmatpush1.bf16.msra.mxu0 %v165
    %189 = vmatprep.subr.bf16.mxu0 0
    %190 = vmatpush1.bf16.msra.mxu0 %v166
    %191 = vmatprep.subr.bf16.mxu0 0
    %192 = vmatpush1.bf16.msra.mxu0 %v167
    %193 = vmatprep.subr.bf16.mxu0 0
    %194 = vmatpush1.bf16.msra.mxu0 %v168
    %195 = vmatprep.subr.bf16.mxu0 0
    %196 = vmatpush1.bf16.msra.mxu0 %v169
    %197 = vmatprep.subr.bf16.mxu0 0
    %198 = vmatpush1.bf16.msra.mxu0 %v185
    %199 = vmatprep.subr.bf16.mxu0 0
    %200 = vmatpush1.bf16.msra.mxu0 0
    %201 = vmatprep.subr.bf16.mxu0 0
    %202 = vmatpush1.bf16.msra.mxu0 0
    %203 = vmatprep.subr.bf16.mxu0 0
    %204 = vmatpush1.bf16.msra.mxu0 0
    %205 = vmatprep.subr.bf16.mxu0 0
    %206 = vmatpush1.bf16.msra.mxu0 0
    %207 = vmatprep.subr.bf16.mxu0 0
    %208 = vmatpush1.bf16.msra.mxu0 0
    %209 = vmatprep.subr.bf16.mxu0 0
    %210 = vmatpush1.bf16.msra.mxu0 0
    %211 = vmatprep.subr.bf16.mxu0 0
    %212 = vmatpush1.bf16.msra.mxu0 0
    %213 = vmatprep.subr.bf16.mxu0 0
    %214 = vmatpush1.bf16.msra.mxu0 0
    %215 = vmatprep.subr.bf16.mxu0 0
    %216 = vmatpush1.bf16.msra.mxu0 0
    %217 = vmatprep.subr.bf16.mxu0 0
    %218 = vmatpush1.bf16.msra.mxu0 0
    %219 = vmatprep.mubr.bf16.mxu0 0
    %220 = vmatmul.mubr.bf16.gmra.mrb[0].mxu0 %v178
    %v221 = vpop.f32.mrb[0].mxu0
    %v222 = vadd.f32 %v141, %v221
    %v223 = vpop.f32.mrb[0].mxu0
    %v224 = vpop.f32.mrb[0].mxu0
    %v225 = vadd.f32 %v141, %v224
    %v226 = vpop.f32.mrb[0].mxu0
    %227 = vdwg.mxu0
    %v228 = vmax.f32 %v222, 0.0
    %v229 = vmax.f32 %v225, 0.0
    %v230 = vpack.c.bf16 %v229, %v228
    %v231 = vld [vmem:[#allocation7] sm:$0xf]
    %v232 = vld [vmem:[#allocation7 + $0x4] sm:$0xf]
    %v233 = vld [vmem:[#allocation7 + $0x8] sm:$0xf]
    %v234 = vld [vmem:[#allocation7 + $0xc] sm:$0xf]
    %v235 = vld [vmem:[#allocation7 + $0x10] sm:$0xf]
    %v236 = vld [vmem:[#allocation7 + $0x14] sm:$0xf]
    %v237 = vld [vmem:[#allocation7 + $0x18] sm:$0xf]
    %v238 = vld [vmem:[#allocation7 + $0x1c] sm:$0xf]
    %v239 = vld [vmem:[#allocation7 + $0x20] sm:$0xf]
    %v240 = vld [vmem:[#allocation7 + $0x24] sm:$0xf]
    %v241 = vld [vmem:[#allocation7 + $0x28] sm:$0xf]
    %v242 = vld [vmem:[#allocation7 + $0x2c] sm:$0xf]
    %v243 = vld [vmem:[#allocation7 + $0x30] sm:$0xf]
    %v244 = vld [vmem:[#allocation7 + $0x34] sm:$0xf]
    %v245 = vld [vmem:[#allocation7 + $0x38] sm:$0xf]
    %v246 = vld [vmem:[#allocation7 + $0x3c] sm:$0xf]
    %v247 = vld [vmem:[%s4] sm:$0x1]
    %v249 = vlaneseq
    %v250 = vshrl.u32 %v249, 7
    %v251 = vsub.s32 0, %v250
    %v252 = vrot.slane %v247, %v251
    %v270 = vunpack.c.l.b16 %v231
    %v271 = vunpack.c.l.b16 %v232
    %v272 = vunpack.c.l.b16 %v233
    %v273 = vunpack.c.l.b16 %v234
    %v274 = vunpack.c.l.b16 %v235
    %v275 = vunpack.c.l.b16 %v236
    %v276 = vunpack.c.l.b16 %v237
    %v277 = vunpack.c.l.b16 %v238
    %v278 = vunpack.c.l.b16 %v239
    %v279 = vunpack.c.l.b16 %v240
    %v280 = vunpack.c.l.b16 %v241
    %v281 = vunpack.c.l.b16 %v242
    %v282 = vunpack.c.l.b16 %v243
    %v283 = vunpack.c.l.b16 %v244
    %v284 = vunpack.c.l.b16 %v245
    %v285 = vunpack.c.l.b16 %v246
    %v286 = vpack.c.b16 %v271, %v270
    %v287 = vpack.c.b16 %v273, %v272
    %v288 = vpack.c.b16 %v275, %v274
    %v289 = vpack.c.b16 %v277, %v276
    %v290 = vpack.c.b16 %v279, %v278
    %v291 = vpack.c.b16 %v281, %v280
    %v292 = vpack.c.b16 %v283, %v282
    %v293 = vpack.c.b16 %v285, %v284
    %302 = vmatprep.subr.bf16.mxu0 0
    %303 = vmatpush1.bf16.msra.mxu0 %v286
    %304 = vmatprep.subr.bf16.mxu0 0
    %305 = vmatpush1.bf16.msra.mxu0 %v287
    %306 = vmatprep.subr.bf16.mxu0 0
    %307 = vmatpush1.bf16.msra.mxu0 %v288
    %308 = vmatprep.subr.bf16.mxu0 0
    %309 = vmatpush1.bf16.msra.mxu0 %v289
    %310 = vmatprep.subr.bf16.mxu0 0
    %311 = vmatpush1.bf16.msra.mxu0 %v290
    %312 = vmatprep.subr.bf16.mxu0 0
    %313 = vmatpush1.bf16.msra.mxu0 %v291
    %314 = vmatprep.subr.bf16.mxu0 0
    %315 = vmatpush1.bf16.msra.mxu0 %v292
    %316 = vmatprep.subr.bf16.mxu0 0
    %317 = vmatpush1.bf16.msra.mxu0 %v293
    %318 = vmatprep.subr.bf16.mxu0 0
    %319 = vmatpush1.bf16.msra.mxu0 0
    %320 = vmatprep.subr.bf16.mxu0 0
    %321 = vmatpush1.bf16.msra.mxu0 0
    %322 = vmatprep.subr.bf16.mxu0 0
    %323 = vmatpush1.bf16.msra.mxu0 0
    %324 = vmatprep.subr.bf16.mxu0 0
    %325 = vmatpush1.bf16.msra.mxu0 0
    %326 = vmatprep.subr.bf16.mxu0 0
    %327 = vmatpush1.bf16.msra.mxu0 0
    %328 = vmatprep.subr.bf16.mxu0 0
    %329 = vmatpush1.bf16.msra.mxu0 0
    %330 = vmatprep.subr.bf16.mxu0 0
    %331 = vmatpush1.bf16.msra.mxu0 0
    %332 = vmatprep.subr.bf16.mxu0 0
    %333 = vmatpush1.bf16.msra.mxu0 0
    %334 = vmatprep.mubr.bf16.mxu0 0
    %335 = vmatmul.mubr.bf16.gmra.mrb[0].mxu0 %v230
    %v336 = vpop.f32.mrb[0].mxu0
    %v337 = vadd.f32 %v252, %v336
    %v338 = vpop.f32.mrb[0].mxu0
    %v339 = vpop.f32.mrb[0].mxu0
    %v340 = vadd.f32 %v252, %v339
    %v341 = vpop.f32.mrb[0].mxu0
    %342 = vdwg.mxu0
    %v343 = vmax.f32 %v337, 0.0
    %v344 = vmax.f32 %v340, 0.0
    %v345 = vpack.c.bf16 %v344, %v343
    %v346 = vld [vmem:[#allocation8] sm:$0xf]
    %v347 = vld [vmem:[#allocation8 + $0x4] sm:$0xf]
    %v348 = vld [vmem:[#allocation8 + $0x8] sm:$0xf]
    %v349 = vld [vmem:[#allocation8 + $0xc] sm:$0xf]
    %v350 = vld [vmem:[#allocation8 + $0x10] sm:$0xf]
    %v351 = vld [vmem:[#allocation8 + $0x14] sm:$0xf]
    %v352 = vld [vmem:[#allocation8 + $0x18] sm:$0xf]
    %v353 = vld [vmem:[#allocation8 + $0x1c] sm:$0xf]
    %v354 = vld [vmem:[#allocation8 + $0x20] sm:$0xf]
    %v355 = vld [vmem:[#allocation8 + $0x24] sm:$0xf]
    %v356 = vld [vmem:[#allocation8 + $0x28] sm:$0xf]
    %v357 = vld [vmem:[#allocation8 + $0x2c] sm:$0xf]
    %v358 = vld [vmem:[#allocation8 + $0x30] sm:$0xf]
    %v359 = vld [vmem:[#allocation8 + $0x34] sm:$0xf]
    %v360 = vld [vmem:[#allocation8 + $0x38] sm:$0xf]
    %v361 = vld [vmem:[#allocation8 + $0x3c] sm:$0xf]
    %v362 = vld [vmem:[%s6] sm:$0x1]
    %v364 = vlaneseq
    %v365 = vshrl.u32 %v364, 7
    %v366 = vsub.s32 0, %v365
    %v367 = vrot.slane %v362, %v366
    %v385 = vunpack.c.l.b16 %v346
    %v386 = vunpack.c.l.b16 %v347
    %v387 = vunpack.c.l.b16 %v348
    %v388 = vunpack.c.l.b16 %v349
    %v389 = vunpack.c.l.b16 %v350
    %v390 = vunpack.c.l.b16 %v351
    %v391 = vunpack.c.l.b16 %v352
    %v392 = vunpack.c.l.b16 %v353
    %v393 = vunpack.c.l.b16 %v354
    %v394 = vunpack.c.l.b16 %v355
    %v395 = vunpack.c.l.b16 %v356
    %v396 = vunpack.c.l.b16 %v357
    %v397 = vunpack.c.l.b16 %v358
    %v398 = vunpack.c.l.b16 %v359
    %v399 = vunpack.c.l.b16 %v360
    %v400 = vunpack.c.l.b16 %v361
    %v401 = vpack.c.b16 %v386, %v385
    %v402 = vpack.c.b16 %v388, %v387
    %v403 = vpack.c.b16 %v390, %v389
    %v404 = vpack.c.b16 %v392, %v391
    %v405 = vpack.c.b16 %v394, %v393
    %v406 = vpack.c.b16 %v396, %v395
    %v407 = vpack.c.b16 %v398, %v397
    %v408 = vpack.c.b16 %v400, %v399
    %417 = vmatprep.subr.bf16.mxu0 0
    %418 = vmatpush1.bf16.msra.mxu0 %v401
    %419 = vmatprep.subr.bf16.mxu0 0
    %420 = vmatpush1.bf16.msra.mxu0 %v402
    %421 = vmatprep.subr.bf16.mxu0 0
    %422 = vmatpush1.bf16.msra.mxu0 %v403
    %423 = vmatprep.subr.bf16.mxu0 0
    %424 = vmatpush1.bf16.msra.mxu0 %v404
    %425 = vmatprep.subr.bf16.mxu0 0
    %426 = vmatpush1.bf16.msra.mxu0 %v405
    %427 = vmatprep.subr.bf16.mxu0 0
    %428 = vmatpush1.bf16.msra.mxu0 %v406
    %429 = vmatprep.subr.bf16.mxu0 0
    %430 = vmatpush1.bf16.msra.mxu0 %v407
    %431 = vmatprep.subr.bf16.mxu0 0
    %432 = vmatpush1.bf16.msra.mxu0 %v408
    %433 = vmatprep.subr.bf16.mxu0 0
    %434 = vmatpush1.bf16.msra.mxu0 0
    %435 = vmatprep.subr.bf16.mxu0 0
    %436 = vmatpush1.bf16.msra.mxu0 0
    %437 = vmatprep.subr.bf16.mxu0 0
    %438 = vmatpush1.bf16.msra.mxu0 0
    %439 = vmatprep.subr.bf16.mxu0 0
    %440 = vmatpush1.bf16.msra.mxu0 0
    %441 = vmatprep.subr.bf16.mxu0 0
    %442 = vmatpush1.bf16.msra.mxu0 0
    %443 = vmatprep.subr.bf16.mxu0 0
    %444 = vmatpush1.bf16.msra.mxu0 0
    %445 = vmatprep.subr.bf16.mxu0 0
    %446 = vmatpush1.bf16.msra.mxu0 0
    %447 = vmatprep.subr.bf16.mxu0 0
    %448 = vmatpush1.bf16.msra.mxu0 0
    %449 = vmatprep.mubr.bf16.mxu0 0
    %450 = vmatmul.mubr.bf16.gmra.mrb[0].mxu0 %v345
    %v451 = vpop.f32.mrb[0].mxu0
    %v452 = vadd.f32 %v367, %v451
    %v453 = vpop.f32.mrb[0].mxu0
    %v454 = vpop.f32.mrb[0].mxu0
    %v455 = vadd.f32 %v367, %v454
    %v456 = vpop.f32.mrb[0].mxu0
    %457 = vdwg.mxu0
    %v458 = vmax.f32 %v452, 0.0
    %v459 = vmax.f32 %v455, 0.0
    %v460 = vpack.c.bf16 %v459, %v458
    %v461 = vld [vmem:[#allocation10] sm:$0xf]
    %v462 = vld [vmem:[#allocation10 + $0x4] sm:$0xf]
    %v463 = vld [vmem:[#allocation10 + $0x8] sm:$0xf]
    %v464 = vld [vmem:[#allocation10 + $0xc] sm:$0xf]
    %v465 = vld [vmem:[#allocation10 + $0x10] sm:$0xf]
    %v466 = vld [vmem:[#allocation10 + $0x14] sm:$0xf]
    %v467 = vld [vmem:[#allocation10 + $0x18] sm:$0xf]
    %v468 = vld [vmem:[#allocation10 + $0x1c] sm:$0xf]
    %v469 = vld [vmem:[#allocation10 + $0x20] sm:$0xf]
    %v470 = vld [vmem:[#allocation10 + $0x24] sm:$0xf]
    %v471 = vld [vmem:[#allocation10 + $0x28] sm:$0xf]
    %v472 = vld [vmem:[#allocation10 + $0x2c] sm:$0xf]
    %v473 = vld [vmem:[#allocation10 + $0x30] sm:$0xf]
    %v474 = vld [vmem:[#allocation10 + $0x34] sm:$0xf]
    %v475 = vld [vmem:[#allocation10 + $0x38] sm:$0xf]
    %v476 = vld [vmem:[#allocation10 + $0x3c] sm:$0xf]
    %v477 = vld [vmem:[%s8] sm:$0x1]
    %v479 = vlaneseq
    %v480 = vshrl.u32 %v479, 7
    %v481 = vsub.s32 0, %v480
    %v482 = vrot.slane %v477, %v481
    %v500 = vunpack.c.l.b16 %v461
    %v501 = vunpack.c.l.b16 %v462
    %v502 = vunpack.c.l.b16 %v463
    %v503 = vunpack.c.l.b16 %v464
    %v504 = vunpack.c.l.b16 %v465
    %v505 = vunpack.c.l.b16 %v466
    %v506 = vunpack.c.l.b16 %v467
    %v507 = vunpack.c.l.b16 %v468
    %v508 = vunpack.c.l.b16 %v469
    %v509 = vunpack.c.l.b16 %v470
    %v510 = vunpack.c.l.b16 %v471
    %v511 = vunpack.c.l.b16 %v472
    %v512 = vunpack.c.l.b16 %v473
    %v513 = vunpack.c.l.b16 %v474
    %v514 = vunpack.c.l.b16 %v475
    %v515 = vunpack.c.l.b16 %v476
    %v516 = vpack.c.b16 %v501, %v500
    %v517 = vpack.c.b16 %v503, %v502
    %v518 = vpack.c.b16 %v505, %v504
    %v519 = vpack.c.b16 %v507, %v506
    %v520 = vpack.c.b16 %v509, %v508
    %v521 = vpack.c.b16 %v511, %v510
    %v522 = vpack.c.b16 %v513, %v512
    %v523 = vpack.c.b16 %v515, %v514
    %532 = vmatprep.subr.bf16.mxu0 0
    %533 = vmatpush1.bf16.msra.mxu0 %v516
    %534 = vmatprep.subr.bf16.mxu0 0
    %535 = vmatpush1.bf16.msra.mxu0 %v517
    %536 = vmatprep.subr.bf16.mxu0 0
    %537 = vmatpush1.bf16.msra.mxu0 %v518
    %538 = vmatprep.subr.bf16.mxu0 0
    %539 = vmatpush1.bf16.msra.mxu0 %v519
    %540 = vmatprep.subr.bf16.mxu0 0
    %541 = vmatpush1.bf16.msra.mxu0 %v520
    %542 = vmatprep.subr.bf16.mxu0 0
    %543 = vmatpush1.bf16.msra.mxu0 %v521
    %544 = vmatprep.subr.bf16.mxu0 0
    %545 = vmatpush1.bf16.msra.mxu0 %v522
    %546 = vmatprep.subr.bf16.mxu0 0
    %547 = vmatpush1.bf16.msra.mxu0 %v523
    %548 = vmatprep.subr.bf16.mxu0 0
    %549 = vmatpush1.bf16.msra.mxu0 0
    %550 = vmatprep.subr.bf16.mxu0 0
    %551 = vmatpush1.bf16.msra.mxu0 0
    %552 = vmatprep.subr.bf16.mxu0 0
    %553 = vmatpush1.bf16.msra.mxu0 0
    %554 = vmatprep.subr.bf16.mxu0 0
    %555 = vmatpush1.bf16.msra.mxu0 0
    %556 = vmatprep.subr.bf16.mxu0 0
    %557 = vmatpush1.bf16.msra.mxu0 0
    %558 = vmatprep.subr.bf16.mxu0 0
    %559 = vmatpush1.bf16.msra.mxu0 0
    %560 = vmatprep.subr.bf16.mxu0 0
    %561 = vmatpush1.bf16.msra.mxu0 0
    %562 = vmatprep.subr.bf16.mxu0 0
    %563 = vmatpush1.bf16.msra.mxu0 0
    %564 = vmatprep.mubr.bf16.mxu0 0
    %565 = vmatmul.mubr.bf16.gmra.mrb[0].mxu0 %v460
    %v566 = vpop.f32.mrb[0].mxu0
    %v567 = vadd.f32 %v482, %v566
    %v568 = vpop.f32.mrb[0].mxu0
    %v569 = vpop.f32.mrb[0].mxu0
    %v570 = vadd.f32 %v482, %v569
    %v571 = vpop.f32.mrb[0].mxu0
    %572 = vdwg.mxu0
    %v573 = vmax.f32 %v567, 0.0
    %v574 = vmax.f32 %v570, 0.0
    %v575 = vpack.c.bf16 %v574, %v573
    %v576 = vld [vmem:[#allocation11] sm:$0xf]
    %v577 = vld [vmem:[#allocation11 + $0x4] sm:$0xf]
    %v578 = vld [vmem:[#allocation11 + $0x8] sm:$0xf]
    %v579 = vld [vmem:[#allocation11 + $0xc] sm:$0xf]
    %v580 = vld [vmem:[#allocation11 + $0x10] sm:$0xf]
    %v581 = vld [vmem:[#allocation11 + $0x14] sm:$0xf]
    %v582 = vld [vmem:[#allocation11 + $0x18] sm:$0xf]
    %v583 = vld [vmem:[#allocation11 + $0x1c] sm:$0xf]
    %v584 = vld [vmem:[#allocation11 + $0x20] sm:$0xf]
    %v585 = vld [vmem:[#allocation11 + $0x24] sm:$0xf]
    %v586 = vld [vmem:[#allocation11 + $0x28] sm:$0xf]
    %v587 = vld [vmem:[#allocation11 + $0x2c] sm:$0xf]
    %v588 = vld [vmem:[#allocation11 + $0x30] sm:$0xf]
    %v589 = vld [vmem:[#allocation11 + $0x34] sm:$0xf]
    %v590 = vld [vmem:[#allocation11 + $0x38] sm:$0xf]
    %v591 = vld [vmem:[#allocation11 + $0x3c] sm:$0xf]
    %v592 = vld [vmem:[%s10] sm:$0x1]
    %v594 = vlaneseq
    %v595 = vshrl.u32 %v594, 7
    %v596 = vsub.s32 0, %v595
    %v597 = vrot.slane %v592, %v596
    %v615 = vunpack.c.l.b16 %v576
    %v616 = vunpack.c.l.b16 %v577
    %v617 = vunpack.c.l.b16 %v578
    %v618 = vunpack.c.l.b16 %v579
    %v619 = vunpack.c.l.b16 %v580
    %v620 = vunpack.c.l.b16 %v581
    %v621 = vunpack.c.l.b16 %v582
    %v622 = vunpack.c.l.b16 %v583
    %v623 = vunpack.c.l.b16 %v584
    %v624 = vunpack.c.l.b16 %v585
    %v625 = vunpack.c.l.b16 %v586
    %v626 = vunpack.c.l.b16 %v587
    %v627 = vunpack.c.l.b16 %v588
    %v628 = vunpack.c.l.b16 %v589
    %v629 = vunpack.c.l.b16 %v590
    %v630 = vunpack.c.l.b16 %v591
    %v631 = vpack.c.b16 %v616, %v615
    %v632 = vpack.c.b16 %v618, %v617
    %v633 = vpack.c.b16 %v620, %v619
    %v634 = vpack.c.b16 %v622, %v621
    %v635 = vpack.c.b16 %v624, %v623
    %v636 = vpack.c.b16 %v626, %v625
    %v637 = vpack.c.b16 %v628, %v627
    %v638 = vpack.c.b16 %v630, %v629
    %647 = vmatprep.subr.bf16.mxu0 0
    %648 = vmatpush1.bf16.msra.mxu0 %v631
    %649 = vmatprep.subr.bf16.mxu0 0
    %650 = vmatpush1.bf16.msra.mxu0 %v632
    %651 = vmatprep.subr.bf16.mxu0 0
    %652 = vmatpush1.bf16.msra.mxu0 %v633
    %653 = vmatprep.subr.bf16.mxu0 0
    %654 = vmatpush1.bf16.msra.mxu0 %v634
    %655 = vmatprep.subr.bf16.mxu0 0
    %656 = vmatpush1.bf16.msra.mxu0 %v635
    %657 = vmatprep.subr.bf16.mxu0 0
    %658 = vmatpush1.bf16.msra.mxu0 %v636
    %659 = vmatprep.subr.bf16.mxu0 0
    %660 = vmatpush1.bf16.msra.mxu0 %v637
    %661 = vmatprep.subr.bf16.mxu0 0
    %662 = vmatpush1.bf16.msra.mxu0 %v638
    %663 = vmatprep.subr.bf16.mxu0 0
    %664 = vmatpush1.bf16.msra.mxu0 0
    %665 = vmatprep.subr.bf16.mxu0 0
    %666 = vmatpush1.bf16.msra.mxu0 0
    %667 = vmatprep.subr.bf16.mxu0 0
    %668 = vmatpush1.bf16.msra.mxu0 0
    %669 = vmatprep.subr.bf16.mxu0 0
    %670 = vmatpush1.bf16.msra.mxu0 0
    %671 = vmatprep.subr.bf16.mxu0 0
    %672 = vmatpush1.bf16.msra.mxu0 0
    %673 = vmatprep.subr.bf16.mxu0 0
    %674 = vmatpush1.bf16.msra.mxu0 0
    %675 = vmatprep.subr.bf16.mxu0 0
    %676 = vmatpush1.bf16.msra.mxu0 0
    %677 = vmatprep.subr.bf16.mxu0 0
    %678 = vmatpush1.bf16.msra.mxu0 0
    %679 = vmatprep.mubr.bf16.mxu0 0
    %680 = vmatmul.mubr.bf16.gmra.mrb[0].mxu0 %v575
    %v681 = vpop.f32.mrb[0].mxu0
    %v682 = vadd.f32 %v597, %v681
    %v683 = vpop.f32.mrb[0].mxu0
    %v684 = vpop.f32.mrb[0].mxu0
    %v685 = vadd.f32 %v597, %v684
    %v686 = vpop.f32.mrb[0].mxu0
    %687 = vdwg.mxu0
    %688 = vmax.xlane.f32.xlu0 %v682
    %v689 = vpop.xlane.xlu0 %688
    %690 = vmax.xlane.f32.xlu0 %v685
    %v691 = vpop.xlane.xlu0 %690
    %v692 = vsub.f32 %v682, %v689
    %v693 = vsub.f32 %v685, %v691
    %v694 = vmul.f32 %v692, 1.442695
    %v695 = vpow.pop %v694
    %v696 = vmul.f32 %v693, 1.442695
    %v697 = vpow.pop %v696
    %698 = vadd.xlane.f32.xlu0 %v695
    %v699 = vpop.xlane.xlu0 %698
    %700 = vadd.xlane.f32.xlu0 %v697
    %v701 = vpop.xlane.xlu0 %700
    %v702 = vrcp.pop %v699
    %v703 = vrcp.pop %v701
    %v704 = vmul.f32 %v695, %v702
    %v705 = vmul.f32 %v697, %v703
    %vm706 = vcmask 72704
    %707 = vst.msk [vmem:[#allocation13] sm:$0xff] %vm706, %v704
    %708 = vst.msk [vmem:[#allocation13 + $0x8] sm:$0xff] %vm706, %v705
    // Predicated region
    $region70: #{tpu_custom_call.1} parent=1 // pred_check
      _
    $region71: #{tpu_custom_call.1} parent=1 // pred_check_branch
      %710 = sbr.rel (0) target = $region73
    $region72: #{tpu_custom_call.1} parent=1 // pred_region
      %s712 = ssub.s32 256, 256
      %713 = vsyncadd [#allocation4], %s712
      %s714 = sshll.u32 [#allocation13], 4
      %s715 = int_to_ptr.vmem [resolvable:$true] %s714
      %720 = dma.vmem_to_hbm [thread:$0]  %s715, 256, %s11, [#allocation4], 128, 128, 8
    $region73: #{tpu_custom_call.1} parent=1 // pred_fallthru
      _
    // Predicated region
    $region74: #{tpu_custom_call.1} parent=1 // pred_check
      _
    $region75: #{tpu_custom_call.1} parent=1 // pred_check_branch
      %722 = sbr.rel (0) target = $region77
    $region76: #{tpu_custom_call.1} parent=1 // pred_region
      %723 = dma.done [#allocation4], 256
    $region77: #{tpu_custom_call.1} parent=1 // pred_fallthru
      _
    %724 = vsyncpa [#allocation3], 1
    %725 = vsyncpa [#allocation6], 1
    %726 = vsyncpa [#allocation9], 1
    %727 = vsyncpa [#allocation12], 1
    %728 = vsyncpa [#allocation4], 1

</llo_original>
